<compile_context>
chip_gen: v5e
topology: v5e:2x2
jax: 0.10.0
libtpu: 0.0.40
codegen_flags: <defaults>
</compile_context>

<pallas_src>
import functools

import jax
import jax.numpy as jnp
from jax.experimental import pallas as pl
from jax.experimental.pallas import tpu as pltpu

GROUPS = 4


def _round_up(x, m):
    return ((x + m - 1) // m) * m


def _hs_conv_kernel(w_ref, b_ref, f_ref, xa_ref, xb_ref, o_ref, *, wp, tl):
    # w_ref : (9, C, ck) bf16  per-tap dense weights for the kept output chans
    # b_ref : (C, 1)     f32   bias for the kept channels
    # f_ref : (C, 1)     f32   per-row floor: -FLT_MAX (raw rows) / 0 (ReLU rows)
    # xa_ref: (ck, TL)   bf16  flattened padded input, lanes [q0, q0+TL)
    # xb_ref: (ck, HALO) bf16  right halo, lanes [q0+TL, q0+TL+HALO)
    # o_ref : (C, TL)          channels on sublanes, flattened pixels on lanes
    window = jnp.concatenate([xa_ref[...], xb_ref[...]], axis=-1)   # (ck, TL+HALO)
    c_out = o_ref.shape[0]
    acc = jnp.zeros((c_out, tl), jnp.float32)
    # TODO(synk): for compute-bound sizes (2*C/groups >= 128) split this into
    # per-group matmuls to drop the 2x structural-zero FLOP inflation.
    for tap in range(9):
        dy, dx = divmod(tap, 3)
        off = dy * wp + dx                      # static lane offset for this tap
        slab = window[:, off:off + tl]          # (ck, TL) static slice (XLU rotate)
        acc = acc + jnp.dot(w_ref[tap], slab, preferred_element_type=jnp.float32)
    y = jnp.maximum(acc + b_ref[...], f_ref[...])   # bias + selective ReLU in one max
    o_ref[...] = y.astype(o_ref.dtype)


def _pick_spatial_tile(lout_raw, halo):
    # Largest lane-dense tile with bounded round-up waste; must be a multiple of
    # the (power-of-two * 128) halo block so the halo BlockSpec index is exact.
    for tl in (2048, 1024, 512, 256, 128):
        if tl < halo or tl % halo:
            continue
        waste = _round_up(lout_raw, tl) - lout_raw
        if waste <= max(lout_raw // 4, 127):
            return tl
    return max(128, halo)


def prepare_hs_params(weight, bias, in_channels, groups=GROUPS):
    """One-time parameter prep (hoist out of the per-call path).

    weight: (2C, C//groups, 3, 3); bias: (2C,).
    Returns per-tap dense weights for the kept output channels [0, C) over the
    kept input channels [0, C/2), the kept bias, and the selective-ReLU floor.
    """
    c = in_channels
    # Dead-half elimination requires the kept split boundary (C) to coincide
    # with a group boundary of the 2C-output grouped conv -> groups must be even.
    # TODO(synk): fall back to a full-2C conv path for odd `groups`.
    assert c % groups == 0 and groups % 2 == 0, (c, groups)
    cg = c // groups                      # split size (first split kept raw)
    ck = (groups // 2) * cg               # = C // 2 kept input channels

    w_taps = jnp.zeros((9, c, ck), jnp.float32)
    for g in range(groups // 2):
        blk = weight[g * 2 * cg:(g + 1) * 2 * cg].reshape(2 * cg, cg, 9)  # (o, j, t)
        blk = jnp.transpose(blk, (2, 0, 1))                               # (t, o, j)
        w_taps = w_taps.at[:, g * 2 * cg:(g + 1) * 2 * cg,
                           g * cg:(g + 1) * cg].set(blk)
    w_taps = w_taps.astype(jnp.bfloat16)

    b_kept = bias[:c].astype(jnp.float32).reshape(c, 1)
    big_neg = jnp.finfo(jnp.float32).min
    floor = jnp.where(jnp.arange(c) < cg, big_neg, 0.0)
    floor = floor.astype(jnp.float32).reshape(c, 1)
    return w_taps, b_kept, floor


def hs_block_pallas(x_nchw, w_taps, b_kept, floor, groups=GROUPS):
    """x_nchw: (N, C, H, W) -> (N, C, H, W), matching HSBlock.forward."""
    n, c, h, w = x_nchw.shape
    assert c % groups == 0 and groups % 2 == 0, (c, groups)
    cg = c // groups
    ck = (groups // 2) * cg

    wp = w + 2                                   # padded row stride
    lout_raw = h * wp                            # flattened output positions
    halo = 128 * pl.next_power_of_2(pl.cdiv(2 * wp + 2, 128))  # covers all 9 taps
    tl = _pick_spatial_tile(lout_raw, halo)
    lout = _round_up(lout_raw, tl)               # padded -> multiple of TL (>=128)
    lin = _round_up(max((h + 2) * wp, lout + halo), halo)
    s = lout // tl                               # spatial tiles per image
    r = tl // halo

    # ---- per-call input plumbing: pad once, read ~once (no 9x im2col) ----
    xk = x_nchw[:, :ck].astype(jnp.bfloat16)                     # kept half, bf16
    xp = jnp.pad(xk, ((0, 0), (0, 0), (1, 1), (1, 1)))           # (N, ck, H+2, Wp)
    xf = xp.reshape(n, ck, (h + 2) * wp)
    xf = jnp.pad(xf, ((0, 0), (0, 0), (0, lin - (h + 2) * wp)))  # (N, ck, Lin)

    kernel = functools.partial(_hs_conv_kernel, wp=wp, tl=tl)

    out_bytes = jnp.dtype(x_nchw.dtype).itemsize
    vmem_est = 2 * (ck * tl * 2 + ck * halo * 2 + c * tl * out_bytes
                    + 9 * c * ck * 2) + 2 * 2 * c * 4
    cp_kwargs = dict(dimension_semantics=("parallel", "parallel"))
    if 2 * vmem_est > 16 * 1024 * 1024:
        # TODO(synk): row-band halo tiling if a single step ever needs >64 MiB (v7x).
        cp_kwargs["vmem_limit_bytes"] = int(min(2 * vmem_est, 64 * 1024 * 1024))

    out = pl.pallas_call(
        kernel,
        out_shape=jax.ShapeDtypeStruct((n, c, lout), x_nchw.dtype),
        grid=(n, s),
        in_specs=[
            pl.BlockSpec((9, c, ck), lambda ni, ti: (0, 0, 0)),        # weights, resident
            pl.BlockSpec((c, 1), lambda ni, ti: (0, 0)),               # bias
            pl.BlockSpec((c, 1), lambda ni, ti: (0, 0)),               # relu floor
            pl.BlockSpec((pl.Squeezed(), ck, tl),
                         lambda ni, ti: (ni, 0, ti)),                  # main input tile
            pl.BlockSpec((pl.Squeezed(), ck, halo),
                         lambda ni, ti: (ni, 0, (ti + 1) * r)),        # right halo
        ],
        out_specs=pl.BlockSpec((pl.Squeezed(), c, tl),
                               lambda ni, ti: (ni, 0, ti)),
        compiler_params=pltpu.CompilerParams(**cp_kwargs),
    )(w_taps, b_kept, floor, xf, xf)

    # Drop the padded-width garbage columns and the round-up tail.
    return out[:, :, :h * wp].reshape(n, c, h, wp)[:, :, :, :w]


def hs_block_reference(x_nchw, weight, bias, groups=GROUPS):
    """Pure-JAX f32 reference reproducing the PyTorch forward exactly."""
    c = x_nchw.shape[1]
    cg = c // groups
    y = jax.lax.conv_general_dilated(
        x_nchw, weight, window_strides=(1, 1), padding="SAME",
        dimension_numbers=("NCHW", "OIHW", "NCHW"),
        feature_group_count=groups,
        precision=jax.lax.Precision.HIGHEST,
    ) + bias[None, :, None, None]
    return jnp.concatenate(
        [y[:, :cg]] + [jnp.maximum(y[:, i * cg:(i + 1) * cg], 0.0)
                       for i in range(1, groups)], axis=1)


if __name__ == "__main__":
    # Small shapes consistent with the module: N=2, C=8 (divisible by groups=4),
    # H=W=16.
    N, C, H, W = 2, 8, 16, 16
    key = jax.random.PRNGKey(0)
    kx, kw, kb = jax.random.split(key, 3)

    x = jax.random.normal(kx, (N, C, H, W), dtype=jnp.float32)
    # Parameters matching nn.Conv2d(C, 2C, 3, padding=1, groups=4):
    weight = 0.1 * jax.random.normal(kw, (2 * C, C // GROUPS, 3, 3),
                                     dtype=jnp.float32)
    bias = 0.1 * jax.random.normal(kb, (2 * C,), dtype=jnp.float32)

    # One-time parameter prep, hoisted out of the per-call path.
    w_taps, b_kept, floor = prepare_hs_params(weight, bias, C, GROUPS)
    fwd = jax.jit(functools.partial(hs_block_pallas, groups=GROUPS))

    out = jax.block_until_ready(fwd(x, w_taps, b_kept, floor))
    ref = hs_block_reference(x, weight, bias)

    assert out.shape == (N, C, H, W), out.shape
    # The kernel feeds the MXU bf16 operands (f32 accumulation), so compare
    # against the exact-f32 reference at a bf16-appropriate tolerance.
    max_err = float(jnp.max(jnp.abs(out - ref)))
    assert jnp.allclose(out, ref, atol=3e-2, rtol=3e-2), max_err

    print("KERNEL_OK")
</pallas_src>

<mosaic_0001>
module attributes {stable_mosaic.version = 11 : i64} {
  func.func @_hs_conv_kernel(%arg0: i32, %arg1: i32, %arg2: memref<9x8x4xbf16, #tpu.memory_space<vmem>>, %arg3: memref<8x1xf32, #tpu.memory_space<vmem>>, %arg4: memref<8x1xf32, #tpu.memory_space<vmem>>, %arg5: memref<1x4x128xbf16, #tpu.memory_space<vmem>>, %arg6: memref<1x4x128xbf16, #tpu.memory_space<vmem>>, %arg7: memref<1x8x128xf32, #tpu.memory_space<vmem>>) attributes {dimension_semantics = [#tpu.dimension_semantics<parallel>, #tpu.dimension_semantics<parallel>], iteration_bounds = array<i64: 2, 3>, scalar_prefetch = 0 : i64, scratch_operands = 0 : i64, tpu.core_type = #tpu.core_type<tc>, window_params = [{pipeline_mode = #tpu.pipeline_mode<synchronous>, transform_indices = @transform_0, window_bounds = array<i64: 9, 8, 4>}, {pipeline_mode = #tpu.pipeline_mode<synchronous>, transform_indices = @transform_1, window_bounds = array<i64: 8, 1>}, {pipeline_mode = #tpu.pipeline_mode<synchronous>, transform_indices = @transform_2, window_bounds = array<i64: 8, 1>}, {transform_indices = @transform_3, window_bounds = array<i64: 1, 4, 128>}, {transform_indices = @transform_4, window_bounds = array<i64: 1, 4, 128>}, {transform_indices = @transform_5, window_bounds = array<i64: 1, 8, 128>}]} {
    %c0 = arith.constant 0 : index
    %c0_0 = arith.constant 0 : index
    %c0_1 = arith.constant 0 : index
    %0 = vector.load %arg5[%c0, %c0_0, %c0_1] : memref<1x4x128xbf16, #tpu.memory_space<vmem>>, vector<1x4x128xbf16>
    %1 = vector.shape_cast %0 : vector<1x4x128xbf16> to vector<4x128xbf16>
    %c0_2 = arith.constant 0 : index
    %c0_3 = arith.constant 0 : index
    %c0_4 = arith.constant 0 : index
    %2 = vector.load %arg6[%c0_2, %c0_3, %c0_4] : memref<1x4x128xbf16, #tpu.memory_space<vmem>>, vector<1x4x128xbf16>
    %3 = vector.shape_cast %2 : vector<1x4x128xbf16> to vector<4x128xbf16>
    %4 = tpu.concatenate %1, %3 in 1 : vector<4x128xbf16>, vector<4x128xbf16> -> vector<4x256xbf16>
    %cst = arith.constant 0.000000e+00 : f32
    %5 = vector.broadcast %cst : f32 to vector<8x128xf32>
    %6 = vector.extract_strided_slice %4 {offsets = [0, 0], sizes = [4, 128], strides = [1, 1]} : vector<4x256xbf16> to vector<4x128xbf16>
    %c0_5 = arith.constant 0 : index
    %c0_6 = arith.constant 0 : index
    %c0_7 = arith.constant 0 : index
    %7 = vector.load %arg2[%c0_5, %c0_6, %c0_7] : memref<9x8x4xbf16, #tpu.memory_space<vmem>>, vector<1x8x4xbf16>
    %8 = vector.shape_cast %7 : vector<1x8x4xbf16> to vector<8x4xbf16>
    %cst_8 = arith.constant dense<0.000000e+00> : vector<8x128xf32>
    %9 = tpu.matmul %8, %6, %cst_8 {dimension_numbers = #tpu.dot_dimension_numbers<[1], [0], [0], [1], [0, 0, 1, 1], [], []>} : vector<8x4xbf16>, vector<4x128xbf16>, vector<8x128xf32> -> vector<8x128xf32>
    %10 = arith.addf %5, %9 : vector<8x128xf32>
    %11 = vector.extract_strided_slice %4 {offsets = [0, 1], sizes = [4, 128], strides = [1, 1]} : vector<4x256xbf16> to vector<4x128xbf16>
    %c1 = arith.constant 1 : index
    %c0_9 = arith.constant 0 : index
    %c0_10 = arith.constant 0 : index
    %12 = vector.load %arg2[%c1, %c0_9, %c0_10] : memref<9x8x4xbf16, #tpu.memory_space<vmem>>, vector<1x8x4xbf16>
    %13 = vector.shape_cast %12 : vector<1x8x4xbf16> to vector<8x4xbf16>
    %cst_11 = arith.constant dense<0.000000e+00> : vector<8x128xf32>
    %14 = tpu.matmul %13, %11, %cst_11 {dimension_numbers = #tpu.dot_dimension_numbers<[1], [0], [0], [1], [0, 0, 1, 1], [], []>} : vector<8x4xbf16>, vector<4x128xbf16>, vector<8x128xf32> -> vector<8x128xf32>
    %15 = arith.addf %10, %14 : vector<8x128xf32>
    %16 = vector.extract_strided_slice %4 {offsets = [0, 2], sizes = [4, 128], strides = [1, 1]} : vector<4x256xbf16> to vector<4x128xbf16>
    %c2 = arith.constant 2 : index
    %c0_12 = arith.constant 0 : index
    %c0_13 = arith.constant 0 : index
    %17 = vector.load %arg2[%c2, %c0_12, %c0_13] : memref<9x8x4xbf16, #tpu.memory_space<vmem>>, vector<1x8x4xbf16>
    %18 = vector.shape_cast %17 : vector<1x8x4xbf16> to vector<8x4xbf16>
    %cst_14 = arith.constant dense<0.000000e+00> : vector<8x128xf32>
    %19 = tpu.matmul %18, %16, %cst_14 {dimension_numbers = #tpu.dot_dimension_numbers<[1], [0], [0], [1], [0, 0, 1, 1], [], []>} : vector<8x4xbf16>, vector<4x128xbf16>, vector<8x128xf32> -> vector<8x128xf32>
    %20 = arith.addf %15, %19 : vector<8x128xf32>
    %21 = vector.extract_strided_slice %4 {offsets = [0, 18], sizes = [4, 128], strides = [1, 1]} : vector<4x256xbf16> to vector<4x128xbf16>
    %c3 = arith.constant 3 : index
    %c0_15 = arith.constant 0 : index
    %c0_16 = arith.constant 0 : index
    %22 = vector.load %arg2[%c3, %c0_15, %c0_16] : memref<9x8x4xbf16, #tpu.memory_space<vmem>>, vector<1x8x4xbf16>
    %23 = vector.shape_cast %22 : vector<1x8x4xbf16> to vector<8x4xbf16>
    %cst_17 = arith.constant dense<0.000000e+00> : vector<8x128xf32>
    %24 = tpu.matmul %23, %21, %cst_17 {dimension_numbers = #tpu.dot_dimension_numbers<[1], [0], [0], [1], [0, 0, 1, 1], [], []>} : vector<8x4xbf16>, vector<4x128xbf16>, vector<8x128xf32> -> vector<8x128xf32>
    %25 = arith.addf %20, %24 : vector<8x128xf32>
    %26 = vector.extract_strided_slice %4 {offsets = [0, 19], sizes = [4, 128], strides = [1, 1]} : vector<4x256xbf16> to vector<4x128xbf16>
    %c4 = arith.constant 4 : index
    %c0_18 = arith.constant 0 : index
    %c0_19 = arith.constant 0 : index
    %27 = vector.load %arg2[%c4, %c0_18, %c0_19] : memref<9x8x4xbf16, #tpu.memory_space<vmem>>, vector<1x8x4xbf16>
    %28 = vector.shape_cast %27 : vector<1x8x4xbf16> to vector<8x4xbf16>
    %cst_20 = arith.constant dense<0.000000e+00> : vector<8x128xf32>
    %29 = tpu.matmul %28, %26, %cst_20 {dimension_numbers = #tpu.dot_dimension_numbers<[1], [0], [0], [1], [0, 0, 1, 1], [], []>} : vector<8x4xbf16>, vector<4x128xbf16>, vector<8x128xf32> -> vector<8x128xf32>
    %30 = arith.addf %25, %29 : vector<8x128xf32>
    %31 = vector.extract_strided_slice %4 {offsets = [0, 20], sizes = [4, 128], strides = [1, 1]} : vector<4x256xbf16> to vector<4x128xbf16>
    %c5 = arith.constant 5 : index
    %c0_21 = arith.constant 0 : index
    %c0_22 = arith.constant 0 : index
    %32 = vector.load %arg2[%c5, %c0_21, %c0_22] : memref<9x8x4xbf16, #tpu.memory_space<vmem>>, vector<1x8x4xbf16>
    %33 = vector.shape_cast %32 : vector<1x8x4xbf16> to vector<8x4xbf16>
    %cst_23 = arith.constant dense<0.000000e+00> : vector<8x128xf32>
    %34 = tpu.matmul %33, %31, %cst_23 {dimension_numbers = #tpu.dot_dimension_numbers<[1], [0], [0], [1], [0, 0, 1, 1], [], []>} : vector<8x4xbf16>, vector<4x128xbf16>, vector<8x128xf32> -> vector<8x128xf32>
    %35 = arith.addf %30, %34 : vector<8x128xf32>
    %36 = vector.extract_strided_slice %4 {offsets = [0, 36], sizes = [4, 128], strides = [1, 1]} : vector<4x256xbf16> to vector<4x128xbf16>
    %c6 = arith.constant 6 : index
    %c0_24 = arith.constant 0 : index
    %c0_25 = arith.constant 0 : index
    %37 = vector.load %arg2[%c6, %c0_24, %c0_25] : memref<9x8x4xbf16, #tpu.memory_space<vmem>>, vector<1x8x4xbf16>
    %38 = vector.shape_cast %37 : vector<1x8x4xbf16> to vector<8x4xbf16>
    %cst_26 = arith.constant dense<0.000000e+00> : vector<8x128xf32>
    %39 = tpu.matmul %38, %36, %cst_26 {dimension_numbers = #tpu.dot_dimension_numbers<[1], [0], [0], [1], [0, 0, 1, 1], [], []>} : vector<8x4xbf16>, vector<4x128xbf16>, vector<8x128xf32> -> vector<8x128xf32>
    %40 = arith.addf %35, %39 : vector<8x128xf32>
    %41 = vector.extract_strided_slice %4 {offsets = [0, 37], sizes = [4, 128], strides = [1, 1]} : vector<4x256xbf16> to vector<4x128xbf16>
    %c7 = arith.constant 7 : index
    %c0_27 = arith.constant 0 : index
    %c0_28 = arith.constant 0 : index
    %42 = vector.load %arg2[%c7, %c0_27, %c0_28] : memref<9x8x4xbf16, #tpu.memory_space<vmem>>, vector<1x8x4xbf16>
    %43 = vector.shape_cast %42 : vector<1x8x4xbf16> to vector<8x4xbf16>
    %cst_29 = arith.constant dense<0.000000e+00> : vector<8x128xf32>
    %44 = tpu.matmul %43, %41, %cst_29 {dimension_numbers = #tpu.dot_dimension_numbers<[1], [0], [0], [1], [0, 0, 1, 1], [], []>} : vector<8x4xbf16>, vector<4x128xbf16>, vector<8x128xf32> -> vector<8x128xf32>
    %45 = arith.addf %40, %44 : vector<8x128xf32>
    %46 = vector.extract_strided_slice %4 {offsets = [0, 38], sizes = [4, 128], strides = [1, 1]} : vector<4x256xbf16> to vector<4x128xbf16>
    %c8 = arith.constant 8 : index
    %c0_30 = arith.constant 0 : index
    %c0_31 = arith.constant 0 : index
    %47 = vector.load %arg2[%c8, %c0_30, %c0_31] : memref<9x8x4xbf16, #tpu.memory_space<vmem>>, vector<1x8x4xbf16>
    %48 = vector.shape_cast %47 : vector<1x8x4xbf16> to vector<8x4xbf16>
    %cst_32 = arith.constant dense<0.000000e+00> : vector<8x128xf32>
    %49 = tpu.matmul %48, %46, %cst_32 {dimension_numbers = #tpu.dot_dimension_numbers<[1], [0], [0], [1], [0, 0, 1, 1], [], []>} : vector<8x4xbf16>, vector<4x128xbf16>, vector<8x128xf32> -> vector<8x128xf32>
    %50 = arith.addf %45, %49 : vector<8x128xf32>
    %c0_33 = arith.constant 0 : index
    %c0_34 = arith.constant 0 : index
    %51 = vector.load %arg3[%c0_33, %c0_34] : memref<8x1xf32, #tpu.memory_space<vmem>>, vector<8x1xf32>
    %52 = vector.broadcast %51 : vector<8x1xf32> to vector<8x128xf32>
    %53 = arith.addf %50, %52 : vector<8x128xf32>
    %c0_35 = arith.constant 0 : index
    %c0_36 = arith.constant 0 : index
    %54 = vector.load %arg4[%c0_35, %c0_36] : memref<8x1xf32, #tpu.memory_space<vmem>>, vector<8x1xf32>
    %55 = vector.broadcast %54 : vector<8x1xf32> to vector<8x128xf32>
    %56 = arith.maximumf %53, %55 : vector<8x128xf32>
    %c0_37 = arith.constant 0 : index
    %c0_38 = arith.constant 0 : index
    %c0_39 = arith.constant 0 : index
    %57 = vector.load %arg7[%c0_37, %c0_38, %c0_39] : memref<1x8x128xf32, #tpu.memory_space<vmem>>, vector<1x8x128xf32>
    %58 = vector.shape_cast %57 : vector<1x8x128xf32> to vector<8x128xf32>
    %59 = vector.shape_cast %56 : vector<8x128xf32> to vector<1x8x128xf32>
    tpu.vector_store %arg7[%c0_37, %c0_38, %c0_39], %59 {strides = array<i32>} : memref<1x8x128xf32, #tpu.memory_space<vmem>>, vector<1x8x128xf32>,
    return
  }
  func.func @transform_0(%arg0: i32, %arg1: i32) -> (i32, i32, i32) {
    %c0_i32 = arith.constant 0 : i32
    %c0_i32_0 = arith.constant 0 : i32
    %c0_i32_1 = arith.constant 0 : i32
    %c0_i32_2 = arith.constant 0 : i32
    return %c0_i32, %c0_i32_0, %c0_i32_1 : i32, i32, i32
  }
  func.func @transform_1(%arg0: i32, %arg1: i32) -> (i32, i32) {
    %c0_i32 = arith.constant 0 : i32
    %c0_i32_0 = arith.constant 0 : i32
    %c0_i32_1 = arith.constant 0 : i32
    return %c0_i32, %c0_i32_0 : i32, i32
  }
  func.func @transform_2(%arg0: i32, %arg1: i32) -> (i32, i32) {
    %c0_i32 = arith.constant 0 : i32
    %c0_i32_0 = arith.constant 0 : i32
    %c0_i32_1 = arith.constant 0 : i32
    return %c0_i32, %c0_i32_0 : i32, i32
  }
  func.func @transform_3(%arg0: i32, %arg1: i32) -> (i32, i32, i32) {
    %c0_i32 = arith.constant 0 : i32
    %c0_i32_0 = arith.constant 0 : i32
    return %arg0, %c0_i32, %arg1 : i32, i32, i32
  }
  func.func @transform_4(%arg0: i32, %arg1: i32) -> (i32, i32, i32) {
    %c1_i32 = arith.constant 1 : i32
    %0 = arith.addi %arg1, %c1_i32 : i32
    %c1_i32_0 = arith.constant 1 : i32
    %1 = arith.muli %0, %c1_i32_0 : i32
    %c0_i32 = arith.constant 0 : i32
    %c0_i32_1 = arith.constant 0 : i32
    return %arg0, %c0_i32, %1 : i32, i32, i32
  }
  func.func @transform_5(%arg0: i32, %arg1: i32) -> (i32, i32, i32) {
    %c0_i32 = arith.constant 0 : i32
    %c0_i32_0 = arith.constant 0 : i32
    return %arg0, %c0_i32, %arg1 : i32, i32, i32
  }
}

</mosaic_0001>

<llo_original>
// kernel: hs_block_pallas.1
$region0: #{hs_block_pallas.1}
  #allocation0 [shape = 'u32[]', space=smem, size = 0x4, offset = 0x4, fixed_abs, tag = 'smem constant byte address 0x4 - core index']
  #allocation1 [shape = 'u32[72,128]{1,0:T(1,128)}', space=vmem, size = 0x9000, scoped, tag = 'internal scratch']
  %s0 = inlined_call_operand.vmem [shape: bf16[9,8,4], index: 0, kind: input, shape index: {}]
  %s1 = inlined_call_operand.vmem [shape: f32[8,1], index: 1, kind: input, shape index: {}]
  %s2 = inlined_call_operand.vmem [shape: f32[8,1], index: 2, kind: input, shape index: {}]
  %s3 = inlined_call_operand.vmem [shape: bf16[2,4,512], index: 3, kind: input, shape index: {}, may-alias: {3,4}]
  %s4 = inlined_call_operand.vmem [shape: bf16[2,4,512], index: 4, kind: input, shape index: {}, may-alias: {3,4}]
  %s5 = inlined_call_operand.vmem [shape: f32[2,8,384], index: 5, kind: output, shape index: {}]
  %s6 = sld [smem:[#allocation0]]
  $region53: #{hs_block_pallas.1} parent=0
    _
  %s8 = ssub.s32 1, %s6
  %s9 = scalar_select 0, %s8, %s6
  loop: start=0, step=1, limit=8
  $region2: #{hs_block_pallas.1} parent=0 // loop_pre_header
    _
  $region3: #{hs_block_pallas.1} parent=0 // loop_header
    %s11 = sphi 0, %s15
    %p12 = scmp.ge.s32.totalorder %s11, 8
    %s18 = sphi 0, %s30
    %s19 = sphi 0, %s26
    %s20 = sphi 0, %s18
    %s21 = sphi 0, %s19
    %s22 = sphi 0, %s20
    %s23 = sphi 0, %s21
    %s31 = sphi 0, %s31
    %s33 = sphi 0, %s31
    %s34 = sphi 0, %s33
    %s48 = sphi 0, %s34
    %s52 = sphi 0, %s52
    %s54 = sphi 0, %s52
    %s55 = sphi 0, %s54
    %s69 = sphi 0, %s55
    %s73 = sphi 0, %s73
    %s75 = sphi 0, %s73
    %s76 = sphi 0, %s75
    %s90 = sphi 0, %s76
    %s98 = sphi 0, %s100
    %s101 = sphi 0, %s98
    %s102 = sphi 0, %s101
    %s118 = sphi 0, %s102
    %s128 = sphi 0, %s130
    %s131 = sphi 0, %s128
    %s132 = sphi 0, %s131
    %s148 = sphi 0, %s132
    %s156 = sphi 0, %s158
    %s159 = sphi 0, %s156
    %s160 = sphi 0, %s159
    %s176 = sphi 0, %s160
  $region4: #{hs_block_pallas.1} parent=0 // loop_header_branch
    %14 = sbr.rel (%p12) target = $region8
  $region5: #{hs_block_pallas.1} parent=0 // loop_body
    %s16 = ssub.s32 %s11, 1
    %s17 = ssub.s32 %s11, 2
    %s24 = sadd.s32 1, %s19
    %p25 = scmp.ge.s32.totalorder %s24, 3
    %s26 = scalar_select %p25, 0, %s24
    %s27 = sadd.s32 1, %s18
    %s28 = scalar_select %p25, %s27, %s18
    %p29 = scmp.ge.s32.totalorder %s28, 2
    %s30 = scalar_select %p29, 0, %s28
    %s32 = sadd.s32 %s31, 1
    %p35 = scmp.eq.s32.totalorder %s11, 5
    %p36 = scmp.ne.s32.totalorder %s31, %s33
    %p37 = scmp.eq.s32.totalorder %s11, 0
    %p38 = por %p36, %p37
    %p39 = scmp.ne.s32.totalorder %s31, %s33
    %p40 = scmp.eq.s32.totalorder %s16, 5
    %p41 = por %p39, %p40
    %p42 = scmp.ne.s32.totalorder %s33, %s34
    %p43 = scmp.eq.s32.totalorder %s16, 0
    %p44 = por %p42, %p43
    %p45 = scmp.ne.s32.totalorder %s33, %s34
    %p46 = scmp.eq.s32.totalorder %s17, 5
    %p47 = por %p45, %p46
    %p49 = scmp.ne.s32.totalorder %s34, %s48
    %p50 = scmp.eq.s32.totalorder %s17, 0
    %p51 = por %p49, %p50
    %s53 = sadd.s32 %s52, 1
    %p56 = scmp.eq.s32.totalorder %s11, 5
    %p57 = scmp.ne.s32.totalorder %s52, %s54
    %p58 = scmp.eq.s32.totalorder %s11, 0
    %p59 = por %p57, %p58
    %p60 = scmp.ne.s32.totalorder %s52, %s54
    %p61 = scmp.eq.s32.totalorder %s16, 5
    %p62 = por %p60, %p61
    %p63 = scmp.ne.s32.totalorder %s54, %s55
    %p64 = scmp.eq.s32.totalorder %s16, 0
    %p65 = por %p63, %p64
    %p66 = scmp.ne.s32.totalorder %s54, %s55
    %p67 = scmp.eq.s32.totalorder %s17, 5
    %p68 = por %p66, %p67
    %p70 = scmp.ne.s32.totalorder %s55, %s69
    %p71 = scmp.eq.s32.totalorder %s17, 0
    %p72 = por %p70, %p71
    %s74 = sadd.s32 %s73, 1
    %p77 = scmp.eq.s32.totalorder %s11, 5
    %p78 = scmp.ne.s32.totalorder %s73, %s75
    %p79 = scmp.eq.s32.totalorder %s11, 0
    %p80 = por %p78, %p79
    %p81 = scmp.ne.s32.totalorder %s73, %s75
    %p82 = scmp.eq.s32.totalorder %s16, 5
    %p83 = por %p81, %p82
    %p84 = scmp.ne.s32.totalorder %s75, %s76
    %p85 = scmp.eq.s32.totalorder %s16, 0
    %p86 = por %p84, %p85
    %p87 = scmp.ne.s32.totalorder %s75, %s76
    %p88 = scmp.eq.s32.totalorder %s17, 5
    %p89 = por %p87, %p88
    %p91 = scmp.ne.s32.totalorder %s76, %s90
    %p92 = scmp.eq.s32.totalorder %s17, 0
    %p93 = por %p91, %p92
    %s94 = ssub.s32 %s18, %s30
    %s95 = ssub.s32 %s19, %s26
    %s96 = sor.u32 %s94, %s95
    %p97 = scmp.eq.s32.totalorder %s96, 0
    %s99 = sadd.s32 %s98, 1
    %s100 = scalar_select %p97, %s98, %s99
    %p103 = pneg %p97
    %p104 = scmp.eq.s32.totalorder %s11, 5
    %p105 = por %p103, %p104
    %p106 = scmp.ne.s32.totalorder %s98, %s101
    %p107 = scmp.eq.s32.totalorder %s11, 0
    %p108 = por %p106, %p107
    %p109 = scmp.ne.s32.totalorder %s98, %s101
    %p110 = scmp.eq.s32.totalorder %s16, 5
    %p111 = por %p109, %p110
    %p112 = scmp.ne.s32.totalorder %s101, %s102
    %p113 = scmp.eq.s32.totalorder %s16, 0
    %p114 = por %p112, %p113
    %p115 = scmp.ne.s32.totalorder %s101, %s102
    %p116 = scmp.eq.s32.totalorder %s17, 5
    %p117 = por %p115, %p116
    %p119 = scmp.ne.s32.totalorder %s102, %s118
    %p120 = scmp.eq.s32.totalorder %s17, 0
    %p121 = por %p119, %p120
    %s122 = sadd.s32 %s19, 1
    %s123 = sadd.s32 %s26, 1
    %s124 = ssub.s32 %s18, %s30
    %s125 = ssub.s32 %s122, %s123
    %s126 = sor.u32 %s124, %s125
    %p127 = scmp.eq.s32.totalorder %s126, 0
    %s129 = sadd.s32 %s128, 1
    %s130 = scalar_select %p127, %s128, %s129
    %p133 = pneg %p127
    %p134 = scmp.eq.s32.totalorder %s11, 5
    %p135 = por %p133, %p134
    %p136 = scmp.ne.s32.totalorder %s128, %s131
    %p137 = scmp.eq.s32.totalorder %s11, 0
    %p138 = por %p136, %p137
    %p139 = scmp.ne.s32.totalorder %s128, %s131
    %p140 = scmp.eq.s32.totalorder %s16, 5
    %p141 = por %p139, %p140
    %p142 = scmp.ne.s32.totalorder %s131, %s132
    %p143 = scmp.eq.s32.totalorder %s16, 0
    %p144 = por %p142, %p143
    %p145 = scmp.ne.s32.totalorder %s131, %s132
    %p146 = scmp.eq.s32.totalorder %s17, 5
    %p147 = por %p145, %p146
    %p149 = scmp.ne.s32.totalorder %s132, %s148
    %p150 = scmp.eq.s32.totalorder %s17, 0
    %p151 = por %p149, %p150
    %s152 = ssub.s32 %s18, %s30
    %s153 = ssub.s32 %s19, %s26
    %s154 = sor.u32 %s152, %s153
    %p155 = scmp.eq.s32.totalorder %s154, 0
    %s157 = sadd.s32 %s156, 1
    %s158 = scalar_select %p155, %s156, %s157
    %p161 = pneg %p155
    %p162 = scmp.eq.s32.totalorder %s11, 5
    %p163 = por %p161, %p162
    %p164 = scmp.ne.s32.totalorder %s156, %s159
    %p165 = scmp.eq.s32.totalorder %s11, 0
    %p166 = por %p164, %p165
    %p167 = scmp.ne.s32.totalorder %s156, %s159
    %p168 = scmp.eq.s32.totalorder %s16, 5
    %p169 = por %p167, %p168
    %p170 = scmp.ne.s32.totalorder %s159, %s160
    %p171 = scmp.eq.s32.totalorder %s16, 0
    %p172 = por %p170, %p171
    %p173 = scmp.ne.s32.totalorder %s159, %s160
    %p174 = scmp.eq.s32.totalorder %s17, 5
    %p175 = por %p173, %p174
    %p177 = scmp.ne.s32.totalorder %s160, %s176
    %p178 = scmp.eq.s32.totalorder %s17, 0
    %p179 = por %p177, %p178
    %p180 = scmp.le.s32.totalorder 1, %s11
    %p181 = scmp.lt.s32.totalorder %s11, 7
    %p182 = pnand %p180, %p181
    %p183 = pneg %p182
    // Predicated region
    $region9: #{hs_block_pallas.1} parent=5 // pred_check
      _
    $region10: #{hs_block_pallas.1} parent=5 // pred_check_branch
      %185 = sbr.rel (%p182) target = $region12
    $region11: #{hs_block_pallas.1} parent=5 // pred_region
      %s186 = ssub.s32 %s11, 1
      // Predicated region
      $region13: #{hs_block_pallas.1} parent=11 // pred_check
        %p187 = pneg %p44
      $region14: #{hs_block_pallas.1} parent=11 // pred_check_branch
        %189 = sbr.rel (%p187) target = $region16
      $region15: #{hs_block_pallas.1} parent=11 // pred_region
        _
      $region16: #{hs_block_pallas.1} parent=11 // pred_fallthru
        _
      // Predicated region
      $region17: #{hs_block_pallas.1} parent=11 // pred_check
        %p190 = pneg %p65
      $region18: #{hs_block_pallas.1} parent=11 // pred_check_branch
        %192 = sbr.rel (%p190) target = $region20
      $region19: #{hs_block_pallas.1} parent=11 // pred_region
        _
      $region20: #{hs_block_pallas.1} parent=11 // pred_fallthru
        _
      // Predicated region
      $region21: #{hs_block_pallas.1} parent=11 // pred_check
        %p193 = pneg %p86
      $region22: #{hs_block_pallas.1} parent=11 // pred_check_branch
        %195 = sbr.rel (%p193) target = $region24
      $region23: #{hs_block_pallas.1} parent=11 // pred_region
        _
      $region24: #{hs_block_pallas.1} parent=11 // pred_fallthru
        _
    $region12: #{hs_block_pallas.1} parent=5 // pred_fallthru
      _
    %p196 = scmp.lt.s32.totalorder %s11, 6
    // Predicated region
    $region25: #{hs_block_pallas.1} parent=5 // pred_check
      %p197 = pneg %p196
    $region26: #{hs_block_pallas.1} parent=5 // pred_check_branch
      %199 = sbr.rel (%p197) target = $region28
    $region27: #{hs_block_pallas.1} parent=5 // pred_region
      // Predicated region
      $region29: #{hs_block_pallas.1} parent=27 // pred_check
        %p200 = pneg %p108
      $region30: #{hs_block_pallas.1} parent=27 // pred_check_branch
        %202 = sbr.rel (%p200) target = $region32
      $region31: #{hs_block_pallas.1} parent=27 // pred_region
        %p203 = scmp.lt.s32.totalorder %s18, 1
        %s204 = scalar_select %p203, %s18, 1
        %p205 = scmp.lt.s32.totalorder %s19, 3
        %s206 = scalar_select %p205, %s19, 3
        %s207 = smul.addr %s204, 4
        %s208 = sadd.s32 %s206, %s207
        %s209 = smul.addr %s208, 2
        %s210 = scalar_lea.vmem %s3, %s209
      $region32: #{hs_block_pallas.1} parent=27 // pred_fallthru
        _
      // Predicated region
      $region33: #{hs_block_pallas.1} parent=27 // pred_check
        %p211 = pneg %p138
      $region34: #{hs_block_pallas.1} parent=27 // pred_check_branch
        %213 = sbr.rel (%p211) target = $region36
      $region35: #{hs_block_pallas.1} parent=27 // pred_region
        %s214 = sadd.s32 %s19, 1
        %p215 = scmp.lt.s32.totalorder %s18, 1
        %s216 = scalar_select %p215, %s18, 1
        %p217 = scmp.lt.s32.totalorder %s214, 3
        %s218 = scalar_select %p217, %s214, 3
        %s219 = smul.addr %s216, 4
        %s220 = sadd.s32 %s218, %s219
        %s221 = smul.addr %s220, 2
        %s222 = scalar_lea.vmem %s4, %s221
        %s223 = sadd.s32 %s19, 1
      $region36: #{hs_block_pallas.1} parent=27 // pred_fallthru
        _
    $region28: #{hs_block_pallas.1} parent=5 // pred_fallthru
      _
    %p224 = scmp.le.s32.totalorder 1, %s11
    %p225 = scmp.lt.s32.totalorder %s11, 7
    %p226 = pnand %p224, %p225
    %p227 = pneg %p226
    // Predicated region
    $region37: #{hs_block_pallas.1} parent=5 // pred_check
      _
    $region38: #{hs_block_pallas.1} parent=5 // pred_check_branch
      %229 = sbr.rel (%p226) target = $region40
    $region39: #{hs_block_pallas.1} parent=5 // pred_region
      %s230 = ssub.s32 %s11, 1
      %p231 = pneg %p44
      %p232 = pneg %p41
      %p233 = pneg %p65
      %p234 = pneg %p62
      %p235 = pneg %p86
      %p236 = pneg %p83
      %p237 = scmp.lt.s32.totalorder %s20, 1
      %s238 = scalar_select %p237, %s20, 1
      %p239 = scmp.lt.s32.totalorder %s21, 3
      %s240 = scalar_select %p239, %s21, 3
      %s241 = smul.addr %s238, 4
      %s242 = sadd.s32 %s240, %s241
      %s243 = smul.addr %s242, 2
      %s244 = scalar_lea.vmem %s3, %s243
      %p245 = pneg %p114
      %p246 = pneg %p111
      %s247 = sadd.s32 %s21, 1
      %p248 = scmp.lt.s32.totalorder %s20, 1
      %s249 = scalar_select %p248, %s20, 1
      %p250 = scmp.lt.s32.totalorder %s247, 3
      %s251 = scalar_select %p250, %s247, 3
      %s252 = smul.addr %s249, 4
      %s253 = sadd.s32 %s251, %s252
      %s254 = smul.addr %s253, 2
      %s255 = scalar_lea.vmem %s4, %s254
      %p256 = pneg %p144
      %p257 = pneg %p141
      %p258 = pneg %p172
      %p259 = pneg %p169
      %p260 = scmp.lt.s32.totalorder %s20, 1
      %s261 = scalar_select %p260, %s20, 1
      %p262 = scmp.lt.s32.totalorder %s21, 2
      %s263 = scalar_select %p262, %s21, 2
      %s264 = smul.addr %s261, 3
      %s265 = sadd.s32 %s263, %s264
      %s266 = smul.addr %s265, 8
      %s267 = scalar_lea.vmem %s5, %s266
      %p268 = scmp.lt.s32.totalorder %s20, 1
      %s269 = scalar_select %p268, %s20, 1
      %p270 = scmp.lt.s32.totalorder %s21, 3
      %s271 = scalar_select %p270, %s21, 3
      %s272 = smul.addr %s269, 4
      %s273 = sadd.s32 %s271, %s272
      %s274 = smul.addr %s273, 2
      %s275 = scalar_lea.vmem %s3, %s274
      %s276 = sadd.s32 %s21, 1
      %p277 = scmp.lt.s32.totalorder %s20, 1
      %s278 = scalar_select %p277, %s20, 1
      %p279 = scmp.lt.s32.totalorder %s276, 3
      %s280 = scalar_select %p279, %s276, 3
      %s281 = smul.addr %s278, 4
      %s282 = sadd.s32 %s280, %s281
      %s283 = smul.addr %s282, 2
      %s284 = scalar_lea.vmem %s4, %s283
      %s285 = sadd.s32 %s21, 1
      %p286 = scmp.lt.s32.totalorder %s20, 1
      %s287 = scalar_select %p286, %s20, 1
      %p288 = scmp.lt.s32.totalorder %s21, 2
      %s289 = scalar_select %p288, %s21, 2
      %s290 = smul.addr %s287, 3
      %s291 = sadd.s32 %s289, %s290
      %s292 = smul.addr %s291, 8
      %s293 = scalar_lea.vmem %s5, %s292
      %v295 = vld [vmem:[%s275] sm:$0x3]
      %v296 = vld [vmem:[%s284] sm:$0x3]
      %v297 = vld [vmem:[%s0] sm:$0xf]
      %s298 = scalar_lea.vmem %s0, 4
      %v299 = vld [vmem:[%s298] sm:$0xf]
      %302 = vrot.lane.b32.xlu0 %v295, 127
      %v303 = vpop.permute.xlu0 %302
      %304 = vrot.lane.b32.xlu0 %v296, 127
      %v305 = vpop.permute.xlu0 %304
      %vm306 = vcmask 1039360
      %v307 = vsel %vm306, %v303, %v305
      %vm308 = vcmask 31744
      %v310 = vsel %vm308, %v299, 0
      %vm312 = vcmask 1041408
      %v314 = vsel %vm312, %v307, 0
      %316 = vmatpush.bf16.msra.mxu0 0
      %317 = vmatpush.bf16.msra.mxu0 0
      %318 = vmatpush.bf16.msra.mxu0 0
      %319 = vmatpush.bf16.msra.mxu0 0
      %320 = vmatpush.bf16.msra.mxu0 0
      %321 = vmatpush.bf16.msra.mxu0 0
      %322 = vmatpush.bf16.msra.mxu0 0
      %323 = vmatpush.bf16.msra.mxu0 %v314
      %324 = vmatmul.bf16.gmra.mxu0 %v310
      %v325 = vpop.f32.mrf.mxu0
      %v326 = vadd.f32 0.0, %v325
      %v327 = vpop.f32.mrf.mxu0
      %328 = vdwg.mxu0
      %v330 = vsel %vm308, %v297, 0
      %v333 = vsel %vm312, %v295, 0
      %335 = vmatpush.bf16.msra.mxu0 0
      %336 = vmatpush.bf16.msra.mxu0 0
      %337 = vmatpush.bf16.msra.mxu0 0
      %338 = vmatpush.bf16.msra.mxu0 0
      %339 = vmatpush.bf16.msra.mxu0 0
      %340 = vmatpush.bf16.msra.mxu0 0
      %341 = vmatpush.bf16.msra.mxu0 0
      %342 = vmatpush.bf16.msra.mxu0 %v333
      %343 = vmatmul.bf16.gmra.mxu0 %v330
      %v344 = vpop.f32.mrf.mxu0
      %v345 = vadd.f32 %v326, %v344
      %v346 = vpop.f32.mrf.mxu0
      %347 = vdwg.mxu0
      %s348 = scalar_lea.vmem %s0, 8
      %v349 = vld [vmem:[%s348] sm:$0xf]
      %350 = vrot.lane.b32.xlu0 %v295, 126
      %v351 = vpop.permute.xlu0 %350
      %352 = vrot.lane.b32.xlu0 %v296, 126
      %v353 = vpop.permute.xlu0 %352
      %vm354 = vcmask 1031168
      %v355 = vsel %vm354, %v351, %v353
      %v357 = vsel %vm308, %v349, 0
      %v360 = vsel %vm312, %v355, 0
      %362 = vmatpush.bf16.msra.mxu0 0
      %363 = vmatpush.bf16.msra.mxu0 0
      %364 = vmatpush.bf16.msra.mxu0 0
      %365 = vmatpush.bf16.msra.mxu0 0
      %366 = vmatpush.bf16.msra.mxu0 0
      %367 = vmatpush.bf16.msra.mxu0 0
      %368 = vmatpush.bf16.msra.mxu0 0
      %369 = vmatpush.bf16.msra.mxu0 %v360
      %370 = vmatmul.bf16.gmra.mxu0 %v357
      %v371 = vpop.f32.mrf.mxu0
      %v372 = vadd.f32 0.0, %v371
      %v373 = vpop.f32.mrf.mxu0
      %374 = vdwg.mxu0
      %v375 = vadd.f32 %v345, %v372
      %s376 = scalar_lea.vmem %s0, 12
      %v377 = vld [vmem:[%s376] sm:$0xf]
      %378 = vrot.lane.b32.xlu0 %v295, 110
      %v379 = vpop.permute.xlu0 %378
      %380 = vrot.lane.b32.xlu0 %v296, 110
      %v381 = vpop.permute.xlu0 %380
      %vm382 = vcmask 900096
      %v383 = vsel %vm382, %v379, %v381
      %v385 = vsel %vm308, %v377, 0
      %v388 = vsel %vm312, %v383, 0
      %390 = vmatpush.bf16.msra.mxu0 0
      %391 = vmatpush.bf16.msra.mxu0 0
      %392 = vmatpush.bf16.msra.mxu0 0
      %393 = vmatpush.bf16.msra.mxu0 0
      %394 = vmatpush.bf16.msra.mxu0 0
      %395 = vmatpush.bf16.msra.mxu0 0
      %396 = vmatpush.bf16.msra.mxu0 0
      %397 = vmatpush.bf16.msra.mxu0 %v388
      %398 = vmatmul.bf16.gmra.mxu0 %v385
      %v399 = vpop.f32.mrf.mxu0
      %v400 = vadd.f32 0.0, %v399
      %v401 = vpop.f32.mrf.mxu0
      %402 = vdwg.mxu0
      %v403 = vadd.f32 %v375, %v400
      %s404 = scalar_lea.vmem %s0, 16
      %v405 = vld [vmem:[%s404] sm:$0xf]
      %406 = vrot.lane.b32.xlu0 %v295, 109
      %v407 = vpop.permute.xlu0 %406
      %408 = vrot.lane.b32.xlu0 %v296, 109
      %v409 = vpop.permute.xlu0 %408
      %vm410 = vcmask 891904
      %v411 = vsel %vm410, %v407, %v409
      %v413 = vsel %vm308, %v405, 0
      %v416 = vsel %vm312, %v411, 0
      %418 = vmatpush.bf16.msra.mxu0 0
      %419 = vmatpush.bf16.msra.mxu0 0
      %420 = vmatpush.bf16.msra.mxu0 0
      %421 = vmatpush.bf16.msra.mxu0 0
      %422 = vmatpush.bf16.msra.mxu0 0
      %423 = vmatpush.bf16.msra.mxu0 0
      %424 = vmatpush.bf16.msra.mxu0 0
      %425 = vmatpush.bf16.msra.mxu0 %v416
      %426 = vmatmul.bf16.gmra.mxu0 %v413
      %v427 = vpop.f32.mrf.mxu0
      %v428 = vadd.f32 0.0, %v427
      %v429 = vpop.f32.mrf.mxu0
      %430 = vdwg.mxu0
      %v431 = vadd.f32 %v403, %v428
      %s432 = scalar_lea.vmem %s0, 20
      %v433 = vld [vmem:[%s432] sm:$0xf]
      %434 = vrot.lane.b32.xlu0 %v295, 108
      %v435 = vpop.permute.xlu0 %434
      %436 = vrot.lane.b32.xlu0 %v296, 108
      %v437 = vpop.permute.xlu0 %436
      %vm438 = vcmask 883712
      %v439 = vsel %vm438, %v435, %v437
      %v441 = vsel %vm308, %v433, 0
      %v444 = vsel %vm312, %v439, 0
      %446 = vmatpush.bf16.msra.mxu0 0
      %447 = vmatpush.bf16.msra.mxu0 0
      %448 = vmatpush.bf16.msra.mxu0 0
      %449 = vmatpush.bf16.msra.mxu0 0
      %450 = vmatpush.bf16.msra.mxu0 0
      %451 = vmatpush.bf16.msra.mxu0 0
      %452 = vmatpush.bf16.msra.mxu0 0
      %453 = vmatpush.bf16.msra.mxu0 %v444
      %454 = vmatmul.bf16.gmra.mxu0 %v441
      %v455 = vpop.f32.mrf.mxu0
      %v456 = vadd.f32 0.0, %v455
      %v457 = vpop.f32.mrf.mxu0
      %458 = vdwg.mxu0
      %v459 = vadd.f32 %v431, %v456
      %s460 = scalar_lea.vmem %s0, 24
      %v461 = vld [vmem:[%s460] sm:$0xf]
      %462 = vrot.lane.b32.xlu0 %v295, 92
      %v463 = vpop.permute.xlu0 %462
      %464 = vrot.lane.b32.xlu0 %v296, 92
      %v465 = vpop.permute.xlu0 %464
      %vm466 = vcmask 752640
      %v467 = vsel %vm466, %v463, %v465
      %v469 = vsel %vm308, %v461, 0
      %v472 = vsel %vm312, %v467, 0
      %474 = vmatpush.bf16.msra.mxu0 0
      %475 = vmatpush.bf16.msra.mxu0 0
      %476 = vmatpush.bf16.msra.mxu0 0
      %477 = vmatpush.bf16.msra.mxu0 0
      %478 = vmatpush.bf16.msra.mxu0 0
      %479 = vmatpush.bf16.msra.mxu0 0
      %480 = vmatpush.bf16.msra.mxu0 0
      %481 = vmatpush.bf16.msra.mxu0 %v472
      %482 = vmatmul.bf16.gmra.mxu0 %v469
      %v483 = vpop.f32.mrf.mxu0
      %v484 = vadd.f32 0.0, %v483
      %v485 = vpop.f32.mrf.mxu0
      %486 = vdwg.mxu0
      %v487 = vadd.f32 %v459, %v484
      %s488 = scalar_lea.vmem %s0, 28
      %v489 = vld [vmem:[%s488] sm:$0xf]
      %490 = vrot.lane.b32.xlu0 %v295, 91
      %v491 = vpop.permute.xlu0 %490
      %492 = vrot.lane.b32.xlu0 %v296, 91
      %v493 = vpop.permute.xlu0 %492
      %vm494 = vcmask 744448
      %v495 = vsel %vm494, %v491, %v493
      %v497 = vsel %vm308, %v489, 0
      %v500 = vsel %vm312, %v495, 0
      %502 = vmatpush.bf16.msra.mxu0 0
      %503 = vmatpush.bf16.msra.mxu0 0
      %504 = vmatpush.bf16.msra.mxu0 0
      %505 = vmatpush.bf16.msra.mxu0 0
      %506 = vmatpush.bf16.msra.mxu0 0
      %507 = vmatpush.bf16.msra.mxu0 0
      %508 = vmatpush.bf16.msra.mxu0 0
      %509 = vmatpush.bf16.msra.mxu0 %v500
      %510 = vmatmul.bf16.gmra.mxu0 %v497
      %v511 = vpop.f32.mrf.mxu0
      %v512 = vadd.f32 0.0, %v511
      %v513 = vpop.f32.mrf.mxu0
      %514 = vdwg.mxu0
      %v515 = vadd.f32 %v487, %v512
      %s516 = scalar_lea.vmem %s0, 32
      %v517 = vld [vmem:[%s516] sm:$0xf]
      %518 = vrot.lane.b32.xlu0 %v295, 90
      %v519 = vpop.permute.xlu0 %518
      %520 = vrot.lane.b32.xlu0 %v296, 90
      %v521 = vpop.permute.xlu0 %520
      %vm522 = vcmask 736256
      %v523 = vsel %vm522, %v519, %v521
      %v525 = vsel %vm308, %v517, 0
      %v528 = vsel %vm312, %v523, 0
      %530 = vmatpush.bf16.msra.mxu0 0
      %531 = vmatpush.bf16.msra.mxu0 0
      %532 = vmatpush.bf16.msra.mxu0 0
      %533 = vmatpush.bf16.msra.mxu0 0
      %534 = vmatpush.bf16.msra.mxu0 0
      %535 = vmatpush.bf16.msra.mxu0 0
      %536 = vmatpush.bf16.msra.mxu0 0
      %537 = vmatpush.bf16.msra.mxu0 %v528
      %538 = vmatmul.bf16.gmra.mxu0 %v525
      %v539 = vpop.f32.mrf.mxu0
      %v540 = vadd.f32 0.0, %v539
      %v541 = vpop.f32.mrf.mxu0
      %542 = vdwg.mxu0
      %v543 = vadd.f32 %v515, %v540
      %v544 = vld [vmem:[%s1] sm:$0xff]
      %546 = vset.pattern.permute.xlu0 0
      %547 = vperm.xlu0 %546, %v544
      %v548 = vpop.permute.xlu0 %547
      %v550 = vadd.f32 %v543, %v548
      %v551 = vld [vmem:[%s2] sm:$0xff]
      %553 = vset.pattern.permute.xlu0 0
      %554 = vperm.xlu0 %553, %v551
      %v555 = vpop.permute.xlu0 %554
      %v557 = vmax.f32 %v550, %v555
      %558 = vst [vmem:[%s293] sm:$0xff] %v557
      %p559 = scmp.lt.s32.totalorder %s20, 1
      %s560 = scalar_select %p559, %s20, 1
      %p561 = scmp.lt.s32.totalorder %s21, 2
      %s562 = scalar_select %p561, %s21, 2
      %s563 = smul.addr %s560, 3
      %s564 = sadd.s32 %s562, %s563
      %s565 = smul.addr %s564, 8
      %s566 = scalar_lea.vmem %s5, %s565
      // Predicated region
      $region41: #{hs_block_pallas.1} parent=39 // pred_check
        %p567 = pneg %p169
      $region42: #{hs_block_pallas.1} parent=39 // pred_check_branch
        %569 = sbr.rel (%p567) target = $region44
      $region43: #{hs_block_pallas.1} parent=39 // pred_region
        _
      $region44: #{hs_block_pallas.1} parent=39 // pred_fallthru
        _
    $region40: #{hs_block_pallas.1} parent=5 // pred_fallthru
      _
    %p570 = scmp.le.s32.totalorder 2, %s11
    // Predicated region
    $region45: #{hs_block_pallas.1} parent=5 // pred_check
      %p571 = pneg %p570
    $region46: #{hs_block_pallas.1} parent=5 // pred_check_branch
      %573 = sbr.rel (%p571) target = $region48
    $region47: #{hs_block_pallas.1} parent=5 // pred_region
      %s574 = ssub.s32 %s11, 2
      // Predicated region
      $region49: #{hs_block_pallas.1} parent=47 // pred_check
        %p575 = pneg %p175
      $region50: #{hs_block_pallas.1} parent=47 // pred_check_branch
        %577 = sbr.rel (%p575) target = $region52
      $region51: #{hs_block_pallas.1} parent=47 // pred_region
        %p578 = scmp.lt.s32.totalorder %s22, 1
        %s579 = scalar_select %p578, %s22, 1
        %p580 = scmp.lt.s32.totalorder %s23, 2
        %s581 = scalar_select %p580, %s23, 2
        %s582 = smul.addr %s579, 3
        %s583 = sadd.s32 %s581, %s582
        %s584 = smul.addr %s583, 8
        %s585 = scalar_lea.vmem %s5, %s584
      $region52: #{hs_block_pallas.1} parent=47 // pred_fallthru
        _
    $region48: #{hs_block_pallas.1} parent=5 // pred_fallthru
      _
  $region6: #{hs_block_pallas.1} parent=0 // loop_footer
    %s15 = sadd.s32 1, %s11
  $region7: #{hs_block_pallas.1} parent=0 // loop_footer_branch
    %10 = sbr.rel target = $region3
  $region8: #{hs_block_pallas.1} parent=0 // loop_exit
    _

</llo_original>
